<compile_context>
chip_gen: v7x
topology: tpu7x:2x2x1
jax: 0.10.0
libtpu: 0.0.40
codegen_flags: <defaults>
</compile_context>

<pallas_src>
import jax
import jax.numpy as jnp
import numpy as np
from jax.experimental import pallas as pl
from jax.experimental.pallas import tpu as pltpu

EPS = 1e-5


# ------------------------------ fused kernel --------------------------------

def _make_routeb_kernel(H, W, Cin, Cout):
    """Build the fused per-image kernel for a fixed (H, W, Cin, Cout)."""
    HW = H * W
    base = ((W + 1 + 127) // 128) * 128      # 128-aligned offset of the image start
    P = HW + 2 * base                        # padded flat length (pad strips both sides)
    taps = [(dy, dx) for dy in (-1, 0, 1) for dx in (-1, 0, 1)]

    def kernel(x_ref, colx_ref, w1t_ref, s1_ref, t1_ref, w3t_ref, s3_ref, t3_ref,
               o_ref, xf_s, y1f_s, patch_s):
        # colx holds the x-coordinate of each flattened pixel; it masks the
        # dx = +/-1 shifts that would otherwise wrap across image rows.
        colx = colx_ref[...]                                   # (1, HW) f32
        colx_in = jnp.broadcast_to(colx, (Cin, HW))
        left_in = colx_in >= 1.0
        right_in = colx_in <= float(W - 2)
        colx_md = jnp.broadcast_to(colx, (Cout, HW))
        left_md = colx_md >= 1.0
        right_md = colx_md <= float(W - 2)

        # ---- Stage 1: 3x3 / stride 1 / pad 1 max-pool on the VMEM tile ----
        xf_s[...] = jnp.full(xf_s.shape, -jnp.inf, jnp.float32)
        xf_s[:, base:base + HW] = x_ref[0].astype(jnp.float32)
        pooled = xf_s[:, base:base + HW]                       # center tap
        for dy, dx in taps:
            if dy == 0 and dx == 0:
                continue
            s = dy * W + dx
            win = xf_s[:, base + s:base + s + HW]
            if dx == -1:
                win = jnp.where(left_in, win, -jnp.inf)
            elif dx == 1:
                win = jnp.where(right_in, win, -jnp.inf)
            pooled = jnp.maximum(pooled, win)                  # (Cin, HW)

        # ---- Stage 2: 1x1 conv + folded BN(+bias) + ReLU:  Y^T = W1^T @ X^T ----
        y1 = jnp.dot(w1t_ref[...], pooled, preferred_element_type=jnp.float32)
        y1 = jnp.maximum(y1 * s1_ref[...] + t1_ref[...], 0.0)  # (Cout, HW)

        # ---- Stage 3: 3x3 conv as ONE im2col matmul (K = 9*Cout) + BN + ReLU ----
        y1f_s[...] = jnp.zeros(y1f_s.shape, jnp.float32)
        y1f_s[:, base:base + HW] = y1
        for t, (dy, dx) in enumerate(taps):
            s = dy * W + dx
            win = y1f_s[:, base + s:base + s + HW]
            if dx == -1:
                win = jnp.where(left_md, win, 0.0)
            elif dx == 1:
                win = jnp.where(right_md, win, 0.0)
            patch_s[t * Cout:(t + 1) * Cout, :] = win          # build im2col once
        y3 = jnp.dot(w3t_ref[...], patch_s[...], preferred_element_type=jnp.float32)
        y3 = jnp.maximum(y3 * s3_ref[...] + t3_ref[...], 0.0)  # (Cout, HW)

        o_ref[0] = y3.astype(o_ref.dtype)

    return kernel, P


# ------------------------------ wrapper --------------------------------------

def _fold_bn(gamma, beta, mean, var):
    scale = gamma / jnp.sqrt(var + EPS)
    shift = beta - mean * scale
    return scale, shift


def routeb_forward(x_nchw, p):
    # BatchNorm is applied in inference mode (running stats folded into scale/shift).
    N, Cin, H, W = x_nchw.shape
    Cout = p["w1"].shape[1]
    HW = H * W

    # Fold BN, then fold the conv bias into the shift: (y + b)*s + t == y*s + (b*s + t)
    s1, t1 = _fold_bn(p["bn1_gamma"], p["bn1_beta"], p["bn1_mean"], p["bn1_var"])
    s3, t3 = _fold_bn(p["bn3_gamma"], p["bn3_beta"], p["bn3_mean"], p["bn3_var"])
    t1 = p["b1"] * s1 + t1
    t3 = p["b3"] * s3 + t3

    w1t = jnp.asarray(p["w1"], jnp.float32).T                          # (Cout, Cin)
    w3t = jnp.asarray(p["w3"], jnp.float32).reshape(9 * Cout, Cout).T  # (Cout, 9*Cout)
    s1c, t1c, s3c, t3c = (v.astype(jnp.float32).reshape(Cout, 1)
                          for v in (s1, t1, s3, t3))

    # x-coordinate of each flattened pixel (masks the dx shifts in-kernel).
    colx = (jnp.arange(HW, dtype=jnp.int32) % W).astype(jnp.float32).reshape(1, HW)
    # Free, contiguous reshape — no transpose, no padded HBM copy.
    x_flat = x_nchw.reshape(N, Cin, HW)

    kernel, P = _make_routeb_kernel(H, W, Cin, Cout)

    out_flat = pl.pallas_call(
        kernel,
        out_shape=jax.ShapeDtypeStruct((N, Cout, HW), x_nchw.dtype),
        grid=(N,),
        in_specs=[
            pl.BlockSpec((1, Cin, HW), lambda n: (n, 0, 0)),   # image (flattened NCHW)
            pl.BlockSpec((1, HW), lambda n: (0, 0)),           # column index
            pl.BlockSpec((Cout, Cin), lambda n: (0, 0)),       # W1^T
            pl.BlockSpec((Cout, 1), lambda n: (0, 0)),         # scale1
            pl.BlockSpec((Cout, 1), lambda n: (0, 0)),         # shift1 (bias folded)
            pl.BlockSpec((Cout, 9 * Cout), lambda n: (0, 0)),  # W3^T (im2col layout)
            pl.BlockSpec((Cout, 1), lambda n: (0, 0)),         # scale3
            pl.BlockSpec((Cout, 1), lambda n: (0, 0)),         # shift3 (bias folded)
        ],
        out_specs=pl.BlockSpec((1, Cout, HW), lambda n: (n, 0, 0)),
        scratch_shapes=[
            pltpu.VMEM((Cin, P), jnp.float32),        # -inf padded flat input
            pltpu.VMEM((Cout, P), jnp.float32),       # zero padded flat y1
            pltpu.VMEM((9 * Cout, HW), jnp.float32),  # im2col patch (K, H*W)
        ],
        compiler_params=pltpu.CompilerParams(
            dimension_semantics=("parallel",)),
    )(x_flat, colx, w1t, s1c, t1c, w3t, s3c, t3c)

    return out_flat.reshape(N, Cout, H, W)


# ------------------------------ params ----------------------------------------

def init_routeb_params(key, in_channel, out_channel, dtype=jnp.float32):
    ks = jax.random.split(key, 10)
    p = {}
    # CBR_1x1: Conv2d(in, out, k=1, bias=True) + BatchNorm2d(out)
    p["w1"] = jax.random.normal(ks[0], (in_channel, out_channel), dtype) * 0.3
    p["b1"] = jax.random.normal(ks[1], (out_channel,), dtype) * 0.1
    p["bn1_gamma"] = 1.0 + 0.1 * jax.random.normal(ks[2], (out_channel,), dtype)
    p["bn1_beta"] = 0.1 * jax.random.normal(ks[3], (out_channel,), dtype)
    p["bn1_mean"] = 0.1 * jax.random.normal(ks[4], (out_channel,), dtype)
    p["bn1_var"] = jax.random.uniform(ks[5], (out_channel,), dtype, 0.5, 1.5)
    # CBR_3x3: Conv2d(out, out, k=3, pad=1, bias=True) + BatchNorm2d(out)
    p["w3"] = jax.random.normal(ks[6], (3, 3, out_channel, out_channel), dtype) * 0.1
    p["b3"] = jax.random.normal(ks[7], (out_channel,), dtype) * 0.1
    p["bn3_gamma"] = 1.0 + 0.1 * jax.random.normal(ks[8], (out_channel,), dtype)
    p["bn3_beta"] = 0.1 * jax.random.normal(ks[9], (out_channel,), dtype)
    p["bn3_mean"] = jnp.zeros((out_channel,), dtype)
    p["bn3_var"] = jnp.ones((out_channel,), dtype)
    return p


# ------------------------------ reference (pure JAX) ---------------------------

def routeb_reference(x_nchw, p):
    x = jnp.transpose(x_nchw, (0, 2, 3, 1))
    x = jax.lax.reduce_window(x, -jnp.inf, jax.lax.max,
                              (1, 3, 3, 1), (1, 1, 1, 1), "SAME")
    dn = ("NHWC", "HWIO", "NHWC")
    s1, t1 = _fold_bn(p["bn1_gamma"], p["bn1_beta"], p["bn1_mean"], p["bn1_var"])
    w1 = p["w1"][None, None]                           # (1,1,Cin,Cout)
    x = jax.lax.conv_general_dilated(x, w1, (1, 1), "SAME", dimension_numbers=dn,
                                     precision=jax.lax.Precision.HIGHEST)
    x = jnp.maximum((x + p["b1"]) * s1 + t1, 0.0)
    s3, t3 = _fold_bn(p["bn3_gamma"], p["bn3_beta"], p["bn3_mean"], p["bn3_var"])
    x = jax.lax.conv_general_dilated(x, p["w3"], (1, 1), "SAME",
                                     dimension_numbers=dn,
                                     precision=jax.lax.Precision.HIGHEST)
    x = jnp.maximum((x + p["b3"]) * s3 + t3, 0.0)
    return jnp.transpose(x, (0, 3, 1, 2))


# ------------------------------ main -------------------------------------------

if __name__ == "__main__":
    key = jax.random.PRNGKey(0)
    k_x, k_p = jax.random.split(key)

    N, Cin, H, W = 2, 4, 16, 16
    Cout = 8
    x = jax.random.normal(k_x, (N, Cin, H, W), jnp.float32)   # NCHW like PyTorch
    params = init_routeb_params(k_p, Cin, Cout)

    out = jax.block_until_ready(jax.jit(routeb_forward)(x, params))
    ref = jax.block_until_ready(routeb_reference(x, params))

    assert out.shape == (N, Cout, H, W), out.shape
    np.testing.assert_allclose(np.asarray(out), np.asarray(ref),
                               rtol=1e-3, atol=1e-3)
    print("KERNEL_OK")
</pallas_src>

<mosaic_0001>
module attributes {stable_mosaic.version = 11 : i64} {
  func.func @kernel(%arg0: i32, %arg1: memref<1x4x256xf32, #tpu.memory_space<vmem>>, %arg2: memref<1x256xf32, #tpu.memory_space<vmem>>, %arg3: memref<8x4xf32, #tpu.memory_space<vmem>>, %arg4: memref<8x1xf32, #tpu.memory_space<vmem>>, %arg5: memref<8x1xf32, #tpu.memory_space<vmem>>, %arg6: memref<8x72xf32, #tpu.memory_space<vmem>>, %arg7: memref<8x1xf32, #tpu.memory_space<vmem>>, %arg8: memref<8x1xf32, #tpu.memory_space<vmem>>, %arg9: memref<1x8x256xf32, #tpu.memory_space<vmem>>, %arg10: memref<4x512xf32, #tpu.memory_space<vmem>>, %arg11: memref<8x512xf32, #tpu.memory_space<vmem>>, %arg12: memref<72x256xf32, #tpu.memory_space<vmem>>) attributes {dimension_semantics = [#tpu.dimension_semantics<parallel>], iteration_bounds = array<i64: 2>, scalar_prefetch = 0 : i64, scratch_operands = 3 : i64, tpu.core_type = #tpu.core_type<tc>, window_params = [{transform_indices = @transform_0, window_bounds = array<i64: 1, 4, 256>}, {pipeline_mode = #tpu.pipeline_mode<synchronous>, transform_indices = @transform_1, window_bounds = array<i64: 1, 256>}, {pipeline_mode = #tpu.pipeline_mode<synchronous>, transform_indices = @transform_2, window_bounds = array<i64: 8, 4>}, {pipeline_mode = #tpu.pipeline_mode<synchronous>, transform_indices = @transform_3, window_bounds = array<i64: 8, 1>}, {pipeline_mode = #tpu.pipeline_mode<synchronous>, transform_indices = @transform_4, window_bounds = array<i64: 8, 1>}, {pipeline_mode = #tpu.pipeline_mode<synchronous>, transform_indices = @transform_5, window_bounds = array<i64: 8, 72>}, {pipeline_mode = #tpu.pipeline_mode<synchronous>, transform_indices = @transform_6, window_bounds = array<i64: 8, 1>}, {pipeline_mode = #tpu.pipeline_mode<synchronous>, transform_indices = @transform_7, window_bounds = array<i64: 8, 1>}, {transform_indices = @transform_8, window_bounds = array<i64: 1, 8, 256>}]} {
    %c0 = arith.constant 0 : index
    %c0_0 = arith.constant 0 : index
    %0 = vector.load %arg2[%c0, %c0_0] : memref<1x256xf32, #tpu.memory_space<vmem>>, vector<1x256xf32>
    %1 = vector.shape_cast %0 : vector<1x256xf32> to vector<1x256xf32>
    %2 = vector.broadcast %1 : vector<1x256xf32> to vector<4x256xf32>
    %cst = arith.constant 1.000000e+00 : f32
    %3 = vector.broadcast %cst : f32 to vector<4x256xf32>
    %4 = arith.cmpf oge, %2, %3 : vector<4x256xf32>
    %cst_1 = arith.constant 1.400000e+01 : f32
    %5 = vector.broadcast %cst_1 : f32 to vector<4x256xf32>
    %6 = arith.cmpf ole, %2, %5 : vector<4x256xf32>
    %7 = vector.shape_cast %0 : vector<1x256xf32> to vector<1x256xf32>
    %8 = vector.broadcast %7 : vector<1x256xf32> to vector<8x256xf32>
    %cst_2 = arith.constant 1.000000e+00 : f32
    %9 = vector.broadcast %cst_2 : f32 to vector<8x256xf32>
    %10 = arith.cmpf oge, %8, %9 : vector<8x256xf32>
    %cst_3 = arith.constant 1.400000e+01 : f32
    %11 = vector.broadcast %cst_3 : f32 to vector<8x256xf32>
    %12 = arith.cmpf ole, %8, %11 : vector<8x256xf32>
    %cst_4 = arith.constant 0xFF800000 : f32
    %13 = vector.broadcast %cst_4 : f32 to vector<4x512xf32>
    %c0_5 = arith.constant 0 : index
    %c0_6 = arith.constant 0 : index
    %14 = vector.load %arg10[%c0_5, %c0_6] : memref<4x512xf32, #tpu.memory_space<vmem>>, vector<4x512xf32>
    tpu.vector_store %arg10[%c0_5, %c0_6], %13 {strides = array<i32>} : memref<4x512xf32, #tpu.memory_space<vmem>>, vector<4x512xf32>,
    %c0_7 = arith.constant 0 : index
    %c0_8 = arith.constant 0 : index
    %c0_9 = arith.constant 0 : index
    %15 = vector.load %arg1[%c0_7, %c0_8, %c0_9] : memref<1x4x256xf32, #tpu.memory_space<vmem>>, vector<1x4x256xf32>
    %16 = vector.shape_cast %15 : vector<1x4x256xf32> to vector<4x256xf32>
    %c0_10 = arith.constant 0 : index
    %c128 = arith.constant 128 : index
    %17 = vector.load %arg10[%c0_10, %c128] : memref<4x512xf32, #tpu.memory_space<vmem>>, vector<4x256xf32>
    tpu.vector_store %arg10[%c0_10, %c128], %16 {strides = array<i32>} : memref<4x512xf32, #tpu.memory_space<vmem>>, vector<4x256xf32>,
    %c0_11 = arith.constant 0 : index
    %c128_12 = arith.constant 128 : index
    %18 = vector.load %arg10[%c0_11, %c128_12] : memref<4x512xf32, #tpu.memory_space<vmem>>, vector<4x256xf32>
    %c0_13 = arith.constant 0 : index
    %c111 = arith.constant 111 : index
    %19 = vector.load %arg10[%c0_13, %c111] : memref<4x512xf32, #tpu.memory_space<vmem>>, vector<4x256xf32>
    %cst_14 = arith.constant 0xFF800000 : f32
    %20 = vector.broadcast %cst_14 : f32 to vector<4x256xf32>
    %21 = arith.select %4, %19, %20 : vector<4x256xi1>, vector<4x256xf32>
    %22 = arith.maximumf %18, %21 : vector<4x256xf32>
    %c0_15 = arith.constant 0 : index
    %c112 = arith.constant 112 : index
    %23 = vector.load %arg10[%c0_15, %c112] : memref<4x512xf32, #tpu.memory_space<vmem>>, vector<4x256xf32>
    %24 = arith.maximumf %22, %23 : vector<4x256xf32>
    %c0_16 = arith.constant 0 : index
    %c113 = arith.constant 113 : index
    %25 = vector.load %arg10[%c0_16, %c113] : memref<4x512xf32, #tpu.memory_space<vmem>>, vector<4x256xf32>
    %cst_17 = arith.constant 0xFF800000 : f32
    %26 = vector.broadcast %cst_17 : f32 to vector<4x256xf32>
    %27 = arith.select %6, %25, %26 : vector<4x256xi1>, vector<4x256xf32>
    %28 = arith.maximumf %24, %27 : vector<4x256xf32>
    %c0_18 = arith.constant 0 : index
    %c127 = arith.constant 127 : index
    %29 = vector.load %arg10[%c0_18, %c127] : memref<4x512xf32, #tpu.memory_space<vmem>>, vector<4x256xf32>
    %cst_19 = arith.constant 0xFF800000 : f32
    %30 = vector.broadcast %cst_19 : f32 to vector<4x256xf32>
    %31 = arith.select %4, %29, %30 : vector<4x256xi1>, vector<4x256xf32>
    %32 = arith.maximumf %28, %31 : vector<4x256xf32>
    %c0_20 = arith.constant 0 : index
    %c129 = arith.constant 129 : index
    %33 = vector.load %arg10[%c0_20, %c129] : memref<4x512xf32, #tpu.memory_space<vmem>>, vector<4x256xf32>
    %cst_21 = arith.constant 0xFF800000 : f32
    %34 = vector.broadcast %cst_21 : f32 to vector<4x256xf32>
    %35 = arith.select %6, %33, %34 : vector<4x256xi1>, vector<4x256xf32>
    %36 = arith.maximumf %32, %35 : vector<4x256xf32>
    %c0_22 = arith.constant 0 : index
    %c143 = arith.constant 143 : index
    %37 = vector.load %arg10[%c0_22, %c143] : memref<4x512xf32, #tpu.memory_space<vmem>>, vector<4x256xf32>
    %cst_23 = arith.constant 0xFF800000 : f32
    %38 = vector.broadcast %cst_23 : f32 to vector<4x256xf32>
    %39 = arith.select %4, %37, %38 : vector<4x256xi1>, vector<4x256xf32>
    %40 = arith.maximumf %36, %39 : vector<4x256xf32>
    %c0_24 = arith.constant 0 : index
    %c144 = arith.constant 144 : index
    %41 = vector.load %arg10[%c0_24, %c144] : memref<4x512xf32, #tpu.memory_space<vmem>>, vector<4x256xf32>
    %42 = arith.maximumf %40, %41 : vector<4x256xf32>
    %c0_25 = arith.constant 0 : index
    %c145 = arith.constant 145 : index
    %43 = vector.load %arg10[%c0_25, %c145] : memref<4x512xf32, #tpu.memory_space<vmem>>, vector<4x256xf32>
    %cst_26 = arith.constant 0xFF800000 : f32
    %44 = vector.broadcast %cst_26 : f32 to vector<4x256xf32>
    %45 = arith.select %6, %43, %44 : vector<4x256xi1>, vector<4x256xf32>
    %46 = arith.maximumf %42, %45 : vector<4x256xf32>
    %c0_27 = arith.constant 0 : index
    %c0_28 = arith.constant 0 : index
    %47 = vector.load %arg3[%c0_27, %c0_28] : memref<8x4xf32, #tpu.memory_space<vmem>>, vector<8x4xf32>
    %cst_29 = arith.constant dense<0.000000e+00> : vector<8x256xf32>
    %48 = tpu.matmul %47, %46, %cst_29 {dimension_numbers = #tpu.dot_dimension_numbers<[1], [0], [0], [1], [0, 0, 1, 1], [], []>} : vector<8x4xf32>, vector<4x256xf32>, vector<8x256xf32> -> vector<8x256xf32>
    %c0_30 = arith.constant 0 : index
    %c0_31 = arith.constant 0 : index
    %49 = vector.load %arg4[%c0_30, %c0_31] : memref<8x1xf32, #tpu.memory_space<vmem>>, vector<8x1xf32>
    %50 = vector.broadcast %49 : vector<8x1xf32> to vector<8x256xf32>
    %51 = arith.mulf %48, %50 : vector<8x256xf32>
    %c0_32 = arith.constant 0 : index
    %c0_33 = arith.constant 0 : index
    %52 = vector.load %arg5[%c0_32, %c0_33] : memref<8x1xf32, #tpu.memory_space<vmem>>, vector<8x1xf32>
    %53 = vector.broadcast %52 : vector<8x1xf32> to vector<8x256xf32>
    %54 = arith.addf %51, %53 : vector<8x256xf32>
    %cst_34 = arith.constant 0.000000e+00 : f32
    %55 = vector.broadcast %cst_34 : f32 to vector<8x256xf32>
    %56 = arith.maximumf %54, %55 : vector<8x256xf32>
    %cst_35 = arith.constant 0.000000e+00 : f32
    %57 = vector.broadcast %cst_35 : f32 to vector<8x512xf32>
    %c0_36 = arith.constant 0 : index
    %c0_37 = arith.constant 0 : index
    %58 = vector.load %arg11[%c0_36, %c0_37] : memref<8x512xf32, #tpu.memory_space<vmem>>, vector<8x512xf32>
    tpu.vector_store %arg11[%c0_36, %c0_37], %57 {strides = array<i32>} : memref<8x512xf32, #tpu.memory_space<vmem>>, vector<8x512xf32>,
    %c0_38 = arith.constant 0 : index
    %c128_39 = arith.constant 128 : index
    %59 = vector.load %arg11[%c0_38, %c128_39] : memref<8x512xf32, #tpu.memory_space<vmem>>, vector<8x256xf32>
    tpu.vector_store %arg11[%c0_38, %c128_39], %56 {strides = array<i32>} : memref<8x512xf32, #tpu.memory_space<vmem>>, vector<8x256xf32>,
    %c0_40 = arith.constant 0 : index
    %c111_41 = arith.constant 111 : index
    %60 = vector.load %arg11[%c0_40, %c111_41] : memref<8x512xf32, #tpu.memory_space<vmem>>, vector<8x256xf32>
    %cst_42 = arith.constant 0.000000e+00 : f32
    %61 = vector.broadcast %cst_42 : f32 to vector<8x256xf32>
    %62 = arith.select %10, %60, %61 : vector<8x256xi1>, vector<8x256xf32>
    %c0_43 = arith.constant 0 : index
    %c0_44 = arith.constant 0 : index
    %63 = vector.load %arg12[%c0_43, %c0_44] : memref<72x256xf32, #tpu.memory_space<vmem>>, vector<8x256xf32>
    tpu.vector_store %arg12[%c0_43, %c0_44], %62 {strides = array<i32>} : memref<72x256xf32, #tpu.memory_space<vmem>>, vector<8x256xf32>,
    %c0_45 = arith.constant 0 : index
    %c112_46 = arith.constant 112 : index
    %64 = vector.load %arg11[%c0_45, %c112_46] : memref<8x512xf32, #tpu.memory_space<vmem>>, vector<8x256xf32>
    %c8 = arith.constant 8 : index
    %c0_47 = arith.constant 0 : index
    %65 = vector.load %arg12[%c8, %c0_47] : memref<72x256xf32, #tpu.memory_space<vmem>>, vector<8x256xf32>
    tpu.vector_store %arg12[%c8, %c0_47], %64 {strides = array<i32>} : memref<72x256xf32, #tpu.memory_space<vmem>>, vector<8x256xf32>,
    %c0_48 = arith.constant 0 : index
    %c113_49 = arith.constant 113 : index
    %66 = vector.load %arg11[%c0_48, %c113_49] : memref<8x512xf32, #tpu.memory_space<vmem>>, vector<8x256xf32>
    %cst_50 = arith.constant 0.000000e+00 : f32
    %67 = vector.broadcast %cst_50 : f32 to vector<8x256xf32>
    %68 = arith.select %12, %66, %67 : vector<8x256xi1>, vector<8x256xf32>
    %c16 = arith.constant 16 : index
    %c0_51 = arith.constant 0 : index
    %69 = vector.load %arg12[%c16, %c0_51] : memref<72x256xf32, #tpu.memory_space<vmem>>, vector<8x256xf32>
    tpu.vector_store %arg12[%c16, %c0_51], %68 {strides = array<i32>} : memref<72x256xf32, #tpu.memory_space<vmem>>, vector<8x256xf32>,
    %c0_52 = arith.constant 0 : index
    %c127_53 = arith.constant 127 : index
    %70 = vector.load %arg11[%c0_52, %c127_53] : memref<8x512xf32, #tpu.memory_space<vmem>>, vector<8x256xf32>
    %cst_54 = arith.constant 0.000000e+00 : f32
    %71 = vector.broadcast %cst_54 : f32 to vector<8x256xf32>
    %72 = arith.select %10, %70, %71 : vector<8x256xi1>, vector<8x256xf32>
    %c24 = arith.constant 24 : index
    %c0_55 = arith.constant 0 : index
    %73 = vector.load %arg12[%c24, %c0_55] : memref<72x256xf32, #tpu.memory_space<vmem>>, vector<8x256xf32>
    tpu.vector_store %arg12[%c24, %c0_55], %72 {strides = array<i32>} : memref<72x256xf32, #tpu.memory_space<vmem>>, vector<8x256xf32>,
    %c0_56 = arith.constant 0 : index
    %c128_57 = arith.constant 128 : index
    %74 = vector.load %arg11[%c0_56, %c128_57] : memref<8x512xf32, #tpu.memory_space<vmem>>, vector<8x256xf32>
    %c32 = arith.constant 32 : index
    %c0_58 = arith.constant 0 : index
    %75 = vector.load %arg12[%c32, %c0_58] : memref<72x256xf32, #tpu.memory_space<vmem>>, vector<8x256xf32>
    tpu.vector_store %arg12[%c32, %c0_58], %74 {strides = array<i32>} : memref<72x256xf32, #tpu.memory_space<vmem>>, vector<8x256xf32>,
    %c0_59 = arith.constant 0 : index
    %c129_60 = arith.constant 129 : index
    %76 = vector.load %arg11[%c0_59, %c129_60] : memref<8x512xf32, #tpu.memory_space<vmem>>, vector<8x256xf32>
    %cst_61 = arith.constant 0.000000e+00 : f32
    %77 = vector.broadcast %cst_61 : f32 to vector<8x256xf32>
    %78 = arith.select %12, %76, %77 : vector<8x256xi1>, vector<8x256xf32>
    %c40 = arith.constant 40 : index
    %c0_62 = arith.constant 0 : index
    %79 = vector.load %arg12[%c40, %c0_62] : memref<72x256xf32, #tpu.memory_space<vmem>>, vector<8x256xf32>
    tpu.vector_store %arg12[%c40, %c0_62], %78 {strides = array<i32>} : memref<72x256xf32, #tpu.memory_space<vmem>>, vector<8x256xf32>,
    %c0_63 = arith.constant 0 : index
    %c143_64 = arith.constant 143 : index
    %80 = vector.load %arg11[%c0_63, %c143_64] : memref<8x512xf32, #tpu.memory_space<vmem>>, vector<8x256xf32>
    %cst_65 = arith.constant 0.000000e+00 : f32
    %81 = vector.broadcast %cst_65 : f32 to vector<8x256xf32>
    %82 = arith.select %10, %80, %81 : vector<8x256xi1>, vector<8x256xf32>
    %c48 = arith.constant 48 : index
    %c0_66 = arith.constant 0 : index
    %83 = vector.load %arg12[%c48, %c0_66] : memref<72x256xf32, #tpu.memory_space<vmem>>, vector<8x256xf32>
    tpu.vector_store %arg12[%c48, %c0_66], %82 {strides = array<i32>} : memref<72x256xf32, #tpu.memory_space<vmem>>, vector<8x256xf32>,
    %c0_67 = arith.constant 0 : index
    %c144_68 = arith.constant 144 : index
    %84 = vector.load %arg11[%c0_67, %c144_68] : memref<8x512xf32, #tpu.memory_space<vmem>>, vector<8x256xf32>
    %c56 = arith.constant 56 : index
    %c0_69 = arith.constant 0 : index
    %85 = vector.load %arg12[%c56, %c0_69] : memref<72x256xf32, #tpu.memory_space<vmem>>, vector<8x256xf32>
    tpu.vector_store %arg12[%c56, %c0_69], %84 {strides = array<i32>} : memref<72x256xf32, #tpu.memory_space<vmem>>, vector<8x256xf32>,
    %c0_70 = arith.constant 0 : index
    %c145_71 = arith.constant 145 : index
    %86 = vector.load %arg11[%c0_70, %c145_71] : memref<8x512xf32, #tpu.memory_space<vmem>>, vector<8x256xf32>
    %cst_72 = arith.constant 0.000000e+00 : f32
    %87 = vector.broadcast %cst_72 : f32 to vector<8x256xf32>
    %88 = arith.select %12, %86, %87 : vector<8x256xi1>, vector<8x256xf32>
    %c64 = arith.constant 64 : index
    %c0_73 = arith.constant 0 : index
    %89 = vector.load %arg12[%c64, %c0_73] : memref<72x256xf32, #tpu.memory_space<vmem>>, vector<8x256xf32>
    tpu.vector_store %arg12[%c64, %c0_73], %88 {strides = array<i32>} : memref<72x256xf32, #tpu.memory_space<vmem>>, vector<8x256xf32>,
    %c0_74 = arith.constant 0 : index
    %c0_75 = arith.constant 0 : index
    %90 = vector.load %arg6[%c0_74, %c0_75] : memref<8x72xf32, #tpu.memory_space<vmem>>, vector<8x72xf32>
    %c0_76 = arith.constant 0 : index
    %c0_77 = arith.constant 0 : index
    %91 = vector.load %arg12[%c0_76, %c0_77] : memref<72x256xf32, #tpu.memory_space<vmem>>, vector<72x256xf32>
    %cst_78 = arith.constant dense<0.000000e+00> : vector<8x256xf32>
    %92 = tpu.matmul %90, %91, %cst_78 {dimension_numbers = #tpu.dot_dimension_numbers<[1], [0], [0], [1], [0, 0, 1, 1], [], []>} : vector<8x72xf32>, vector<72x256xf32>, vector<8x256xf32> -> vector<8x256xf32>
    %c0_79 = arith.constant 0 : index
    %c0_80 = arith.constant 0 : index
    %93 = vector.load %arg7[%c0_79, %c0_80] : memref<8x1xf32, #tpu.memory_space<vmem>>, vector<8x1xf32>
    %94 = vector.broadcast %93 : vector<8x1xf32> to vector<8x256xf32>
    %95 = arith.mulf %92, %94 : vector<8x256xf32>
    %c0_81 = arith.constant 0 : index
    %c0_82 = arith.constant 0 : index
    %96 = vector.load %arg8[%c0_81, %c0_82] : memref<8x1xf32, #tpu.memory_space<vmem>>, vector<8x1xf32>
    %97 = vector.broadcast %96 : vector<8x1xf32> to vector<8x256xf32>
    %98 = arith.addf %95, %97 : vector<8x256xf32>
    %cst_83 = arith.constant 0.000000e+00 : f32
    %99 = vector.broadcast %cst_83 : f32 to vector<8x256xf32>
    %100 = arith.maximumf %98, %99 : vector<8x256xf32>
    %c0_84 = arith.constant 0 : index
    %c0_85 = arith.constant 0 : index
    %c0_86 = arith.constant 0 : index
    %101 = vector.load %arg9[%c0_84, %c0_85, %c0_86] : memref<1x8x256xf32, #tpu.memory_space<vmem>>, vector<1x8x256xf32>
    %102 = vector.shape_cast %101 : vector<1x8x256xf32> to vector<8x256xf32>
    %103 = vector.shape_cast %100 : vector<8x256xf32> to vector<1x8x256xf32>
    tpu.vector_store %arg9[%c0_84, %c0_85, %c0_86], %103 {strides = array<i32>} : memref<1x8x256xf32, #tpu.memory_space<vmem>>, vector<1x8x256xf32>,
    return
  }
  func.func @transform_0(%arg0: i32) -> (i32, i32, i32) {
    %c0_i32 = arith.constant 0 : i32
    %c0_i32_0 = arith.constant 0 : i32
    %c0_i32_1 = arith.constant 0 : i32
    return %arg0, %c0_i32, %c0_i32_0 : i32, i32, i32
  }
  func.func @transform_1(%arg0: i32) -> (i32, i32) {
    %c0_i32 = arith.constant 0 : i32
    %c0_i32_0 = arith.constant 0 : i32
    %c0_i32_1 = arith.constant 0 : i32
    return %c0_i32, %c0_i32_0 : i32, i32
  }
  func.func @transform_2(%arg0: i32) -> (i32, i32) {
    %c0_i32 = arith.constant 0 : i32
    %c0_i32_0 = arith.constant 0 : i32
    %c0_i32_1 = arith.constant 0 : i32
    return %c0_i32, %c0_i32_0 : i32, i32
  }
  func.func @transform_3(%arg0: i32) -> (i32, i32) {
    %c0_i32 = arith.constant 0 : i32
    %c0_i32_0 = arith.constant 0 : i32
    %c0_i32_1 = arith.constant 0 : i32
    return %c0_i32, %c0_i32_0 : i32, i32
  }
  func.func @transform_4(%arg0: i32) -> (i32, i32) {
    %c0_i32 = arith.constant 0 : i32
    %c0_i32_0 = arith.constant 0 : i32
    %c0_i32_1 = arith.constant 0 : i32
    return %c0_i32, %c0_i32_0 : i32, i32
  }
  func.func @transform_5(%arg0: i32) -> (i32, i32) {
    %c0_i32 = arith.constant 0 : i32
    %c0_i32_0 = arith.constant 0 : i32
    %c0_i32_1 = arith.constant 0 : i32
    return %c0_i32, %c0_i32_0 : i32, i32
  }
  func.func @transform_6(%arg0: i32) -> (i32, i32) {
    %c0_i32 = arith.constant 0 : i32
    %c0_i32_0 = arith.constant 0 : i32
    %c0_i32_1 = arith.constant 0 : i32
    return %c0_i32, %c0_i32_0 : i32, i32
  }
  func.func @transform_7(%arg0: i32) -> (i32, i32) {
    %c0_i32 = arith.constant 0 : i32
    %c0_i32_0 = arith.constant 0 : i32
    %c0_i32_1 = arith.constant 0 : i32
    return %c0_i32, %c0_i32_0 : i32, i32
  }
  func.func @transform_8(%arg0: i32) -> (i32, i32, i32) {
    %c0_i32 = arith.constant 0 : i32
    %c0_i32_0 = arith.constant 0 : i32
    %c0_i32_1 = arith.constant 0 : i32
    return %arg0, %c0_i32, %c0_i32_0 : i32, i32, i32
  }
}

</mosaic_0001>

<llo_original>
// kernel: routeb_forward.1
$region0: #{routeb_forward.1}
  #allocation0 [shape = 'u32[]', space=smem, size = 0x4, offset = 0x4, fixed_abs, tag = 'smem constant byte address 0x4 - core index']
  #allocation1 [shape = 'u32[144,128]{1,0:T(1,128)}', space=vmem, size = 0x12000, scoped, tag = 'internal scratch']
  #allocation2 [shape = 'f32[4,512]{1,0:T(4,128)}', space=vmem, size = 0x2000, scoped, tag = 'scratch operand']
  #allocation3 [shape = 'f32[8,512]{1,0:T(8,128)}', space=vmem, size = 0x4000, scoped, tag = 'scratch operand']
  #allocation4 [shape = 'f32[72,256]{1,0:T(8,128)}', space=vmem, size = 0x12000, scoped, tag = 'scratch operand']
  %s0 = inlined_call_operand.vmem [shape: f32[2,4,256], index: 0, kind: input, shape index: {}]
  %s1 = inlined_call_operand.vmem [shape: f32[1,256], index: 1, kind: input, shape index: {}]
  %s2 = inlined_call_operand.vmem [shape: f32[8,4], index: 2, kind: input, shape index: {}]
  %s3 = inlined_call_operand.vmem [shape: f32[8,1], index: 3, kind: input, shape index: {}]
  %s4 = inlined_call_operand.vmem [shape: f32[8,1], index: 4, kind: input, shape index: {}]
  %s5 = inlined_call_operand.vmem [shape: f32[8,72], index: 5, kind: input, shape index: {}]
  %s6 = inlined_call_operand.vmem [shape: f32[8,1], index: 6, kind: input, shape index: {}]
  %s7 = inlined_call_operand.vmem [shape: f32[8,1], index: 7, kind: input, shape index: {}]
  %s8 = inlined_call_operand.vmem [shape: f32[2,8,256], index: 8, kind: output, shape index: {}]
  %s9 = sld [smem:[#allocation0]]
  $region65: #{routeb_forward.1} parent=0
    _
  %s11 = ssub.s32 1, %s9
  %s12 = scalar_select 0, %s11, %s9
  loop: start=0, step=1, limit=4
  $region2: #{routeb_forward.1} parent=0 // loop_pre_header
    _
  $region3: #{routeb_forward.1} parent=0 // loop_header
    %s14 = sphi 0, %s18
    %p15 = scmp.ge.s32.totalorder %s14, 4
    %s24 = sphi 0, %s26
    %s27 = sphi 0, %s24
    %s28 = sphi 0, %s27
    %s44 = sphi 0, %s28
    %s48 = sphi 0, %s48
    %s50 = sphi 0, %s48
    %s51 = sphi 0, %s50
    %s65 = sphi 0, %s51
    %s69 = sphi 0, %s69
    %s71 = sphi 0, %s69
    %s72 = sphi 0, %s71
    %s86 = sphi 0, %s72
    %s90 = sphi 0, %s90
    %s92 = sphi 0, %s90
    %s93 = sphi 0, %s92
    %s107 = sphi 0, %s93
    %s111 = sphi 0, %s111
    %s113 = sphi 0, %s111
    %s114 = sphi 0, %s113
    %s128 = sphi 0, %s114
    %s132 = sphi 0, %s132
    %s134 = sphi 0, %s132
    %s135 = sphi 0, %s134
    %s149 = sphi 0, %s135
    %s153 = sphi 0, %s153
    %s155 = sphi 0, %s153
    %s156 = sphi 0, %s155
    %s170 = sphi 0, %s156
    %s174 = sphi 0, %s174
    %s176 = sphi 0, %s174
    %s177 = sphi 0, %s176
    %s191 = sphi 0, %s177
    %s197 = sphi 0, %s199
    %s200 = sphi 0, %s197
    %s201 = sphi 0, %s200
    %s217 = sphi 0, %s201
  $region4: #{routeb_forward.1} parent=0 // loop_header_branch
    %17 = sbr.rel (%p15) target = $region8
  $region5: #{routeb_forward.1} parent=0 // loop_body
    %s19 = ssub.s32 %s14, 1
    %s20 = ssub.s32 %s14, 2
    %s21 = sadd.s32 %s14, 1
    %s22 = ssub.s32 %s14, %s21
    %p23 = scmp.eq.s32.totalorder %s22, 0
    %s25 = sadd.s32 %s24, 1
    %s26 = scalar_select %p23, %s24, %s25
    %p29 = pneg %p23
    %p30 = scmp.eq.s32.totalorder %s14, 1
    %p31 = por %p29, %p30
    %p32 = scmp.ne.s32.totalorder %s24, %s27
    %p33 = scmp.eq.s32.totalorder %s14, 0
    %p34 = por %p32, %p33
    %p35 = scmp.ne.s32.totalorder %s24, %s27
    %p36 = scmp.eq.s32.totalorder %s19, 1
    %p37 = por %p35, %p36
    %p38 = scmp.ne.s32.totalorder %s27, %s28
    %p39 = scmp.eq.s32.totalorder %s19, 0
    %p40 = por %p38, %p39
    %p41 = scmp.ne.s32.totalorder %s27, %s28
    %p42 = scmp.eq.s32.totalorder %s20, 1
    %p43 = por %p41, %p42
    %p45 = scmp.ne.s32.totalorder %s28, %s44
    %p46 = scmp.eq.s32.totalorder %s20, 0
    %p47 = por %p45, %p46
    %s49 = sadd.s32 %s48, 1
    %p52 = scmp.eq.s32.totalorder %s14, 1
    %p53 = scmp.ne.s32.totalorder %s48, %s50
    %p54 = scmp.eq.s32.totalorder %s14, 0
    %p55 = por %p53, %p54
    %p56 = scmp.ne.s32.totalorder %s48, %s50
    %p57 = scmp.eq.s32.totalorder %s19, 1
    %p58 = por %p56, %p57
    %p59 = scmp.ne.s32.totalorder %s50, %s51
    %p60 = scmp.eq.s32.totalorder %s19, 0
    %p61 = por %p59, %p60
    %p62 = scmp.ne.s32.totalorder %s50, %s51
    %p63 = scmp.eq.s32.totalorder %s20, 1
    %p64 = por %p62, %p63
    %p66 = scmp.ne.s32.totalorder %s51, %s65
    %p67 = scmp.eq.s32.totalorder %s20, 0
    %p68 = por %p66, %p67
    %s70 = sadd.s32 %s69, 1
    %p73 = scmp.eq.s32.totalorder %s14, 1
    %p74 = scmp.ne.s32.totalorder %s69, %s71
    %p75 = scmp.eq.s32.totalorder %s14, 0
    %p76 = por %p74, %p75
    %p77 = scmp.ne.s32.totalorder %s69, %s71
    %p78 = scmp.eq.s32.totalorder %s19, 1
    %p79 = por %p77, %p78
    %p80 = scmp.ne.s32.totalorder %s71, %s72
    %p81 = scmp.eq.s32.totalorder %s19, 0
    %p82 = por %p80, %p81
    %p83 = scmp.ne.s32.totalorder %s71, %s72
    %p84 = scmp.eq.s32.totalorder %s20, 1
    %p85 = por %p83, %p84
    %p87 = scmp.ne.s32.totalorder %s72, %s86
    %p88 = scmp.eq.s32.totalorder %s20, 0
    %p89 = por %p87, %p88
    %s91 = sadd.s32 %s90, 1
    %p94 = scmp.eq.s32.totalorder %s14, 1
    %p95 = scmp.ne.s32.totalorder %s90, %s92
    %p96 = scmp.eq.s32.totalorder %s14, 0
    %p97 = por %p95, %p96
    %p98 = scmp.ne.s32.totalorder %s90, %s92
    %p99 = scmp.eq.s32.totalorder %s19, 1
    %p100 = por %p98, %p99
    %p101 = scmp.ne.s32.totalorder %s92, %s93
    %p102 = scmp.eq.s32.totalorder %s19, 0
    %p103 = por %p101, %p102
    %p104 = scmp.ne.s32.totalorder %s92, %s93
    %p105 = scmp.eq.s32.totalorder %s20, 1
    %p106 = por %p104, %p105
    %p108 = scmp.ne.s32.totalorder %s93, %s107
    %p109 = scmp.eq.s32.totalorder %s20, 0
    %p110 = por %p108, %p109
    %s112 = sadd.s32 %s111, 1
    %p115 = scmp.eq.s32.totalorder %s14, 1
    %p116 = scmp.ne.s32.totalorder %s111, %s113
    %p117 = scmp.eq.s32.totalorder %s14, 0
    %p118 = por %p116, %p117
    %p119 = scmp.ne.s32.totalorder %s111, %s113
    %p120 = scmp.eq.s32.totalorder %s19, 1
    %p121 = por %p119, %p120
    %p122 = scmp.ne.s32.totalorder %s113, %s114
    %p123 = scmp.eq.s32.totalorder %s19, 0
    %p124 = por %p122, %p123
    %p125 = scmp.ne.s32.totalorder %s113, %s114
    %p126 = scmp.eq.s32.totalorder %s20, 1
    %p127 = por %p125, %p126
    %p129 = scmp.ne.s32.totalorder %s114, %s128
    %p130 = scmp.eq.s32.totalorder %s20, 0
    %p131 = por %p129, %p130
    %s133 = sadd.s32 %s132, 1
    %p136 = scmp.eq.s32.totalorder %s14, 1
    %p137 = scmp.ne.s32.totalorder %s132, %s134
    %p138 = scmp.eq.s32.totalorder %s14, 0
    %p139 = por %p137, %p138
    %p140 = scmp.ne.s32.totalorder %s132, %s134
    %p141 = scmp.eq.s32.totalorder %s19, 1
    %p142 = por %p140, %p141
    %p143 = scmp.ne.s32.totalorder %s134, %s135
    %p144 = scmp.eq.s32.totalorder %s19, 0
    %p145 = por %p143, %p144
    %p146 = scmp.ne.s32.totalorder %s134, %s135
    %p147 = scmp.eq.s32.totalorder %s20, 1
    %p148 = por %p146, %p147
    %p150 = scmp.ne.s32.totalorder %s135, %s149
    %p151 = scmp.eq.s32.totalorder %s20, 0
    %p152 = por %p150, %p151
    %s154 = sadd.s32 %s153, 1
    %p157 = scmp.eq.s32.totalorder %s14, 1
    %p158 = scmp.ne.s32.totalorder %s153, %s155
    %p159 = scmp.eq.s32.totalorder %s14, 0
    %p160 = por %p158, %p159
    %p161 = scmp.ne.s32.totalorder %s153, %s155
    %p162 = scmp.eq.s32.totalorder %s19, 1
    %p163 = por %p161, %p162
    %p164 = scmp.ne.s32.totalorder %s155, %s156
    %p165 = scmp.eq.s32.totalorder %s19, 0
    %p166 = por %p164, %p165
    %p167 = scmp.ne.s32.totalorder %s155, %s156
    %p168 = scmp.eq.s32.totalorder %s20, 1
    %p169 = por %p167, %p168
    %p171 = scmp.ne.s32.totalorder %s156, %s170
    %p172 = scmp.eq.s32.totalorder %s20, 0
    %p173 = por %p171, %p172
    %s175 = sadd.s32 %s174, 1
    %p178 = scmp.eq.s32.totalorder %s14, 1
    %p179 = scmp.ne.s32.totalorder %s174, %s176
    %p180 = scmp.eq.s32.totalorder %s14, 0
    %p181 = por %p179, %p180
    %p182 = scmp.ne.s32.totalorder %s174, %s176
    %p183 = scmp.eq.s32.totalorder %s19, 1
    %p184 = por %p182, %p183
    %p185 = scmp.ne.s32.totalorder %s176, %s177
    %p186 = scmp.eq.s32.totalorder %s19, 0
    %p187 = por %p185, %p186
    %p188 = scmp.ne.s32.totalorder %s176, %s177
    %p189 = scmp.eq.s32.totalorder %s20, 1
    %p190 = por %p188, %p189
    %p192 = scmp.ne.s32.totalorder %s177, %s191
    %p193 = scmp.eq.s32.totalorder %s20, 0
    %p194 = por %p192, %p193
    %s195 = ssub.s32 %s14, %s21
    %p196 = scmp.eq.s32.totalorder %s195, 0
    %s198 = sadd.s32 %s197, 1
    %s199 = scalar_select %p196, %s197, %s198
    %p202 = pneg %p196
    %p203 = scmp.eq.s32.totalorder %s14, 1
    %p204 = por %p202, %p203
    %p205 = scmp.ne.s32.totalorder %s197, %s200
    %p206 = scmp.eq.s32.totalorder %s14, 0
    %p207 = por %p205, %p206
    %p208 = scmp.ne.s32.totalorder %s197, %s200
    %p209 = scmp.eq.s32.totalorder %s19, 1
    %p210 = por %p208, %p209
    %p211 = scmp.ne.s32.totalorder %s200, %s201
    %p212 = scmp.eq.s32.totalorder %s19, 0
    %p213 = por %p211, %p212
    %p214 = scmp.ne.s32.totalorder %s200, %s201
    %p215 = scmp.eq.s32.totalorder %s20, 1
    %p216 = por %p214, %p215
    %p218 = scmp.ne.s32.totalorder %s201, %s217
    %p219 = scmp.eq.s32.totalorder %s20, 0
    %p220 = por %p218, %p219
    %p221 = scmp.le.s32.totalorder 1, %s14
    %p222 = scmp.lt.s32.totalorder %s14, 3
    %p223 = pnand %p221, %p222
    %p224 = pneg %p223
    // Predicated region
    $region9: #{routeb_forward.1} parent=5 // pred_check
      _
    $region10: #{routeb_forward.1} parent=5 // pred_check_branch
      %226 = sbr.rel (%p223) target = $region12
    $region11: #{routeb_forward.1} parent=5 // pred_region
      %s227 = ssub.s32 %s14, 1
      // Predicated region
      $region13: #{routeb_forward.1} parent=11 // pred_check
        %p228 = pneg %p61
      $region14: #{routeb_forward.1} parent=11 // pred_check_branch
        %230 = sbr.rel (%p228) target = $region16
      $region15: #{routeb_forward.1} parent=11 // pred_region
        _
      $region16: #{routeb_forward.1} parent=11 // pred_fallthru
        _
      // Predicated region
      $region17: #{routeb_forward.1} parent=11 // pred_check
        %p231 = pneg %p82
      $region18: #{routeb_forward.1} parent=11 // pred_check_branch
        %233 = sbr.rel (%p231) target = $region20
      $region19: #{routeb_forward.1} parent=11 // pred_region
        _
      $region20: #{routeb_forward.1} parent=11 // pred_fallthru
        _
      // Predicated region
      $region21: #{routeb_forward.1} parent=11 // pred_check
        %p234 = pneg %p103
      $region22: #{routeb_forward.1} parent=11 // pred_check_branch
        %236 = sbr.rel (%p234) target = $region24
      $region23: #{routeb_forward.1} parent=11 // pred_region
        _
      $region24: #{routeb_forward.1} parent=11 // pred_fallthru
        _
      // Predicated region
      $region25: #{routeb_forward.1} parent=11 // pred_check
        %p237 = pneg %p124
      $region26: #{routeb_forward.1} parent=11 // pred_check_branch
        %239 = sbr.rel (%p237) target = $region28
      $region27: #{routeb_forward.1} parent=11 // pred_region
        _
      $region28: #{routeb_forward.1} parent=11 // pred_fallthru
        _
      // Predicated region
      $region29: #{routeb_forward.1} parent=11 // pred_check
        %p240 = pneg %p145
      $region30: #{routeb_forward.1} parent=11 // pred_check_branch
        %242 = sbr.rel (%p240) target = $region32
      $region31: #{routeb_forward.1} parent=11 // pred_region
        _
      $region32: #{routeb_forward.1} parent=11 // pred_fallthru
        _
      // Predicated region
      $region33: #{routeb_forward.1} parent=11 // pred_check
        %p243 = pneg %p166
      $region34: #{routeb_forward.1} parent=11 // pred_check_branch
        %245 = sbr.rel (%p243) target = $region36
      $region35: #{routeb_forward.1} parent=11 // pred_region
        _
      $region36: #{routeb_forward.1} parent=11 // pred_fallthru
        _
      // Predicated region
      $region37: #{routeb_forward.1} parent=11 // pred_check
        %p246 = pneg %p187
      $region38: #{routeb_forward.1} parent=11 // pred_check_branch
        %248 = sbr.rel (%p246) target = $region40
      $region39: #{routeb_forward.1} parent=11 // pred_region
        _
      $region40: #{routeb_forward.1} parent=11 // pred_fallthru
        _
    $region12: #{routeb_forward.1} parent=5 // pred_fallthru
      _
    %p249 = scmp.lt.s32.totalorder %s14, 2
    // Predicated region
    $region41: #{routeb_forward.1} parent=5 // pred_check
      %p250 = pneg %p249
    $region42: #{routeb_forward.1} parent=5 // pred_check_branch
      %252 = sbr.rel (%p250) target = $region44
    $region43: #{routeb_forward.1} parent=5 // pred_region
      // Predicated region
      $region45: #{routeb_forward.1} parent=43 // pred_check
        %p253 = pneg %p34
      $region46: #{routeb_forward.1} parent=43 // pred_check_branch
        %255 = sbr.rel (%p253) target = $region48
      $region47: #{routeb_forward.1} parent=43 // pred_region
        %p256 = scmp.lt.s32.totalorder %s14, 1
        %s257 = scalar_select %p256, %s14, 1
        %s258 = smul.addr %s257, 2
        %s259 = smul.addr %s258, 4
        %s260 = scalar_lea.vmem %s0, %s259
      $region48: #{routeb_forward.1} parent=43 // pred_fallthru
        _
    $region44: #{routeb_forward.1} parent=5 // pred_fallthru
      _
    %p261 = scmp.le.s32.totalorder 1, %s14
    %p262 = scmp.lt.s32.totalorder %s14, 3
    %p263 = pnand %p261, %p262
    %p264 = pneg %p263
    // Predicated region
    $region49: #{routeb_forward.1} parent=5 // pred_check
      _
    $region50: #{routeb_forward.1} parent=5 // pred_check_branch
      %266 = sbr.rel (%p263) target = $region52
    $region51: #{routeb_forward.1} parent=5 // pred_region
      %s267 = ssub.s32 %s14, 1
      %p268 = scmp.lt.s32.totalorder %s19, 1
      %s269 = scalar_select %p268, %s19, 1
      %s270 = smul.addr %s269, 2
      %s271 = smul.addr %s270, 4
      %s272 = scalar_lea.vmem %s0, %s271
      %p273 = pneg %p40
      %p274 = pneg %p37
      %p275 = pneg %p61
      %p276 = pneg %p58
      %p277 = pneg %p82
      %p278 = pneg %p79
      %p279 = pneg %p103
      %p280 = pneg %p100
      %p281 = pneg %p124
      %p282 = pneg %p121
      %p283 = pneg %p145
      %p284 = pneg %p142
      %p285 = pneg %p166
      %p286 = pneg %p163
      %p287 = pneg %p187
      %p288 = pneg %p184
      %p289 = pneg %p213
      %p290 = pneg %p210
      %p291 = scmp.lt.s32.totalorder %s19, 1
      %s292 = scalar_select %p291, %s19, 1
      %s293 = smul.addr %s292, 2
      %s294 = smul.addr %s293, 8
      %s295 = scalar_lea.vmem %s8, %s294
      %p296 = scmp.lt.s32.totalorder %s19, 1
      %s297 = scalar_select %p296, %s19, 1
      %s298 = smul.addr %s297, 2
      %s299 = smul.addr %s298, 4
      %s300 = scalar_lea.vmem %s0, %s299
      %p301 = scmp.lt.s32.totalorder %s19, 1
      %s302 = scalar_select %p301, %s19, 1
      %s303 = smul.addr %s302, 2
      %s304 = smul.addr %s303, 8
      %s305 = scalar_lea.vmem %s8, %s304
      %v306 = vld [vmem:[%s1] sm:$0x3]
      %v308 = vlaneseq
      %v309 = vshrl.u32 %v308, 7
      %v310 = vsub.s32 0, %v309
      %v311 = vrot.slane %v306, %v310
      %v312 = vlaneseq
      %v313 = vshrl.u32 %v312, 7
      %v314 = vsub.s32 1, %v313
      %v315 = vrot.slane %v306, %v314
      %vm318 = vcmp.ge.f32.partialorder %v311, 1.0
      %vm319 = vcmp.ge.f32.partialorder %v315, 1.0
      %vm320 = vcmp.le.f32.partialorder %v311, 14.0
      %vm321 = vcmp.le.f32.partialorder %v315, 14.0
      %322 = vst [vmem:[#allocation2] sm:$0xff] -inf
      %323 = vst [vmem:[#allocation2 + $0x8] sm:$0xff] -inf
      %v324 = vld [vmem:[%s300] sm:$0xff]
      %325 = vst [vmem:[#allocation2 + $0x4] sm:$0xff] %v324
      %v326 = vld [vmem:[#allocation2 + $0x4] sm:$0xff]
      %v327 = vld [vmem:[#allocation2] sm:$0xff]
      %v328 = vld [vmem:[#allocation2 + $0x8] sm:$0xf]
      %v331 = vcombine.high %v327, %v327
      %332 = vrot.lane.b32.xlu0 %v327, 17
      %v333 = vpop.permute.xlu0 %332
      %334 = vrot.lane.b32.xlu0 %v331, 17
      %v335 = vpop.permute.xlu0 %334
      %336 = vrot.lane.b32.xlu0 %v328, 17
      %v337 = vpop.permute.xlu0 %336
      %vm338 = vcmask 138240
      %v339 = vsel %vm338, %v333, %v335
      %v340 = vsel %vm338, %v335, %v337
      %v343 = vsel %vm318, %v339, -inf
      %v344 = vsel %vm319, %v340, -inf
      %v347 = vcombine.low %v343, %v344
      %v349 = vmax.f32 %v326, %v347
      %350 = vrot.lane.b32.xlu0 %v327, 16
      %v351 = vpop.permute.xlu0 %350
      %352 = vrot.lane.b32.xlu0 %v328, 16
      %v353 = vpop.permute.xlu0 %352
      %v354 = vrot.slane %v351, 4
      %v355 = vrot.slane %v353, 4
      %vm356 = vcmask 1043456
      %v357 = vsel %vm356, %v354, %v355
      %vm358 = vcmask 130048
      %v359 = vsel %vm358, %v351, %v357
      %v361 = vmax.f32 %v349, %v359
      %362 = vrot.lane.b32.xlu0 %v327, 15
      %v363 = vpop.permute.xlu0 %362
      %364 = vrot.lane.b32.xlu0 %v331, 15
      %v365 = vpop.permute.xlu0 %364
      %366 = vrot.lane.b32.xlu0 %v328, 15
      %v367 = vpop.permute.xlu0 %366
      %vm368 = vcmask 121856
      %v369 = vsel %vm368, %v363, %v365
      %v370 = vsel %vm368, %v365, %v367
      %v373 = vsel %vm320, %v369, -inf
      %v374 = vsel %vm321, %v370, -inf
      %v377 = vcombine.low %v373, %v374
      %v379 = vmax.f32 %v361, %v377
      %380 = vrot.lane.b32.xlu0 %v327, 1
      %v381 = vpop.permute.xlu0 %380
      %382 = vrot.lane.b32.xlu0 %v331, 1
      %v383 = vpop.permute.xlu0 %382
      %384 = vrot.lane.b32.xlu0 %v328, 1
      %v385 = vpop.permute.xlu0 %384
      %vm386 = vcmask 7168
      %v387 = vsel %vm386, %v381, %v383
      %v388 = vsel %vm386, %v383, %v385
      %v391 = vsel %vm318, %v387, -inf
      %v392 = vsel %vm319, %v388, -inf
      %v395 = vcombine.low %v391, %v392
      %v397 = vmax.f32 %v379, %v395
      %v398 = vld [vmem:[#allocation2 + $0x4] sm:$0xff]
      %v399 = vld [vmem:[#allocation2 + $0xc] sm:$0xf]
      %v402 = vcombine.high %v398, %v398
      %403 = vrot.lane.b32.xlu0 %v398, 127
      %v404 = vpop.permute.xlu0 %403
      %405 = vrot.lane.b32.xlu0 %v402, 127
      %v406 = vpop.permute.xlu0 %405
      %407 = vrot.lane.b32.xlu0 %v399, 127
      %v408 = vpop.permute.xlu0 %407
      %vm409 = vcmask 1039360
      %v410 = vsel %vm409, %v404, %v406
      %v411 = vsel %vm409, %v406, %v408
      %v414 = vsel %vm320, %v410, -inf
      %v415 = vsel %vm321, %v411, -inf
      %v418 = vcombine.low %v414, %v415
      %v420 = vmax.f32 %v397, %v418
      %421 = vrot.lane.b32.xlu0 %v398, 113
      %v422 = vpop.permute.xlu0 %421
      %423 = vrot.lane.b32.xlu0 %v402, 113
      %v424 = vpop.permute.xlu0 %423
      %425 = vrot.lane.b32.xlu0 %v399, 113
      %v426 = vpop.permute.xlu0 %425
      %vm427 = vcmask 924672
      %v428 = vsel %vm427, %v422, %v424
      %v429 = vsel %vm427, %v424, %v426
      %v432 = vsel %vm318, %v428, -inf
      %v433 = vsel %vm319, %v429, -inf
      %v436 = vcombine.low %v432, %v433
      %v438 = vmax.f32 %v420, %v436
      %439 = vrot.lane.b32.xlu0 %v398, 112
      %v440 = vpop.permute.xlu0 %439
      %441 = vrot.lane.b32.xlu0 %v399, 112
      %v442 = vpop.permute.xlu0 %441
      %v443 = vrot.slane %v440, 4
      %v444 = vrot.slane %v442, 4
      %v445 = vsel %vm356, %v443, %v444
      %vm446 = vcmask 916480
      %v447 = vsel %vm446, %v440, %v445
      %v449 = vmax.f32 %v438, %v447
      %450 = vrot.lane.b32.xlu0 %v398, 111
      %v451 = vpop.permute.xlu0 %450
      %452 = vrot.lane.b32.xlu0 %v402, 111
      %v453 = vpop.permute.xlu0 %452
      %454 = vrot.lane.b32.xlu0 %v399, 111
      %v455 = vpop.permute.xlu0 %454
      %vm456 = vcmask 908288
      %v457 = vsel %vm456, %v451, %v453
      %v458 = vsel %vm456, %v453, %v455
      %v461 = vsel %vm320, %v457, -inf
      %v462 = vsel %vm321, %v458, -inf
      %v465 = vcombine.low %v461, %v462
      %v467 = vmax.f32 %v449, %v465
      %v468 = vld [vmem:[%s2] sm:$0xff]
      %v470 = vcombine.high %v467, %v467
      %vm471 = vcmask 31744
      %v473 = vsel %vm471, %v468, 0
      %v475 = vsel %vm356, %v467, 0
      %v477 = vsel %vm356, %v470, 0
      %479 = vmatprep.subr.mxu0 %v477
      %480 = vmatpush1.msra.mxu0 %v475
      %481 = vmatprep.subr.mxu0 0.0
      %482 = vmatpush1.msra.mxu0 0.0
      %483 = vmatprep.subr.mxu0 0.0
      %484 = vmatpush1.msra.mxu0 0.0
      %485 = vmatprep.subr.mxu0 0.0
      %486 = vmatpush1.msra.mxu0 0.0
      %487 = vmatprep.subr.mxu0 0.0
      %488 = vmatpush1.msra.mxu0 0.0
      %489 = vmatprep.subr.mxu0 0.0
      %490 = vmatpush1.msra.mxu0 0.0
      %491 = vmatprep.subr.mxu0 0.0
      %492 = vmatpush1.msra.mxu0 0.0
      %493 = vmatprep.subr.mxu0 0.0
      %494 = vmatpush1.msra.mxu0 0.0
      %495 = vmatprep.subr.mxu0 0.0
      %496 = vmatpush1.msra.mxu0 0.0
      %497 = vmatprep.subr.mxu0 0.0
      %498 = vmatpush1.msra.mxu0 0.0
      %499 = vmatprep.subr.mxu0 0.0
      %500 = vmatpush1.msra.mxu0 0.0
      %501 = vmatprep.subr.mxu0 0.0
      %502 = vmatpush1.msra.mxu0 0.0
      %503 = vmatprep.subr.mxu0 0.0
      %504 = vmatpush1.msra.mxu0 0.0
      %505 = vmatprep.subr.mxu0 0.0
      %506 = vmatpush1.msra.mxu0 0.0
      %507 = vmatprep.subr.mxu0 0.0
      %508 = vmatpush1.msra.mxu0 0.0
      %509 = vmatprep.subr.mxu0 0.0
      %510 = vmatpush1.msra.mxu0 0.0
      %511 = vmatprep.subr.mxu0 0.0
      %512 = vmatpush1.msra.mxu0 0.0
      %513 = vmatprep.subr.mxu0 0.0
      %514 = vmatpush1.msra.mxu0 0.0
      %515 = vmatprep.subr.mxu0 0.0
      %516 = vmatpush1.msra.mxu0 0.0
      %517 = vmatprep.subr.mxu0 0.0
      %518 = vmatpush1.msra.mxu0 0.0
      %519 = vmatprep.subr.mxu0 0.0
      %520 = vmatpush1.msra.mxu0 0.0
      %521 = vmatprep.subr.mxu0 0.0
      %522 = vmatpush1.msra.mxu0 0.0
      %523 = vmatprep.subr.mxu0 0.0
      %524 = vmatpush1.msra.mxu0 0.0
      %525 = vmatprep.subr.mxu0 0.0
      %526 = vmatpush1.msra.mxu0 0.0
      %527 = vmatprep.subr.mxu0 0.0
      %528 = vmatpush1.msra.mxu0 0.0
      %529 = vmatprep.subr.mxu0 0.0
      %530 = vmatpush1.msra.mxu0 0.0
      %531 = vmatprep.subr.mxu0 0.0
      %532 = vmatpush1.msra.mxu0 0.0
      %533 = vmatprep.subr.mxu0 0.0
      %534 = vmatpush1.msra.mxu0 0.0
      %535 = vmatprep.subr.mxu0 0.0
      %536 = vmatpush1.msra.mxu0 0.0
      %537 = vmatprep.subr.mxu0 0.0
      %538 = vmatpush1.msra.mxu0 0.0
      %539 = vmatprep.subr.mxu0 0.0
      %540 = vmatpush1.msra.mxu0 0.0
      %541 = vmatprep.subr.mxu0 0.0
      %542 = vmatpush1.msra.mxu0 0.0
      %543 = vmatprep.mubr.f32.mxu0 0.0
      %544 = vmatmul.mubr.f32.gmra.mrb[0].mxu0 %v473
      %v545 = vpop.f32.mrb[0].mxu0
      %v546 = vadd.f32 0.0, %v545
      %v547 = vpop.f32.mrb[0].mxu0
      %v548 = vadd.f32 0.0, %v547
      %549 = vdwg.mxu0
      %v550 = vld [vmem:[%s3] sm:$0xff]
      %552 = vset.pattern.permute.xlu0 0
      %553 = vperm.xlu0 %552, %v550
      %v554 = vpop.permute.xlu0 %553
      %v556 = vmul.f32 %v546, %v554
      %v557 = vmul.f32 %v548, %v554
      %v558 = vld [vmem:[%s4] sm:$0xff]
      %560 = vset.pattern.permute.xlu0 0
      %561 = vperm.xlu0 %560, %v558
      %v562 = vpop.permute.xlu0 %561
      %v564 = vadd.f32 %v556, %v562
      %v565 = vadd.f32 %v557, %v562
      %v566 = vmax.f32 %v564, 0.0
      %v567 = vmax.f32 %v565, 0.0
      %568 = vst [vmem:[#allocation3] sm:$0xff] 0.0
      %569 = vst [vmem:[#allocation3 + $0x8] sm:$0xff] 0.0
      %570 = vst [vmem:[#allocation3 + $0x10] sm:$0xff] 0.0
      %571 = vst [vmem:[#allocation3 + $0x18] sm:$0xff] 0.0
      %572 = vst [vmem:[#allocation3 + $0x8] sm:$0xff] %v566
      %573 = vst [vmem:[#allocation3 + $0x10] sm:$0xff] %v567
      %v574 = vld [vmem:[#allocation3] sm:$0xff]
      %v575 = vld [vmem:[#allocation3 + $0x8] sm:$0xff]
      %v576 = vld [vmem:[#allocation3 + $0x10] sm:$0xff]
      %580 = vrot.lane.b32.xlu0 %v574, 17
      %v581 = vpop.permute.xlu0 %580
      %582 = vrot.lane.b32.xlu0 %v575, 17
      %v583 = vpop.permute.xlu0 %582
      %584 = vrot.lane.b32.xlu0 %v576, 17
      %v585 = vpop.permute.xlu0 %584
      %v586 = vsel %vm338, %v581, %v583
      %v587 = vsel %vm338, %v583, %v585
      %v590 = vsel %vm318, %v586, 0.0
      %v591 = vsel %vm319, %v587, 0.0
      %592 = vst [vmem:[#allocation4] sm:$0xff] %v590
      %593 = vst [vmem:[#allocation4 + $0x8] sm:$0xff] %v591
      %v594 = vld [vmem:[#allocation3] sm:$0xff]
      %v595 = vld [vmem:[#allocation3 + $0x8] sm:$0xff]
      %v596 = vld [vmem:[#allocation3 + $0x10] sm:$0xff]
      %600 = vrot.lane.b32.xlu0 %v594, 16
      %v601 = vpop.permute.xlu0 %600
      %602 = vrot.lane.b32.xlu0 %v595, 16
      %v603 = vpop.permute.xlu0 %602
      %604 = vrot.lane.b32.xlu0 %v596, 16
      %v605 = vpop.permute.xlu0 %604
      %v606 = vsel %vm358, %v601, %v603
      %v607 = vsel %vm358, %v603, %v605
      %610 = vst [vmem:[#allocation4 + $0x10] sm:$0xff] %v606
      %611 = vst [vmem:[#allocation4 + $0x18] sm:$0xff] %v607
      %v612 = vld [vmem:[#allocation3] sm:$0xff]
      %v613 = vld [vmem:[#allocation3 + $0x8] sm:$0xff]
      %v614 = vld [vmem:[#allocation3 + $0x10] sm:$0xff]
      %618 = vrot.lane.b32.xlu0 %v612, 15
      %v619 = vpop.permute.xlu0 %618
      %620 = vrot.lane.b32.xlu0 %v613, 15
      %v621 = vpop.permute.xlu0 %620
      %622 = vrot.lane.b32.xlu0 %v614, 15
      %v623 = vpop.permute.xlu0 %622
      %v624 = vsel %vm368, %v619, %v621
      %v625 = vsel %vm368, %v621, %v623
      %v628 = vsel %vm320, %v624, 0.0
      %v629 = vsel %vm321, %v625, 0.0
      %630 = vst [vmem:[#allocation4 + $0x20] sm:$0xff] %v628
      %631 = vst [vmem:[#allocation4 + $0x28] sm:$0xff] %v629
      %v632 = vld [vmem:[#allocation3] sm:$0xff]
      %v633 = vld [vmem:[#allocation3 + $0x8] sm:$0xff]
      %v634 = vld [vmem:[#allocation3 + $0x10] sm:$0xff]
      %638 = vrot.lane.b32.xlu0 %v632, 1
      %v639 = vpop.permute.xlu0 %638
      %640 = vrot.lane.b32.xlu0 %v633, 1
      %v641 = vpop.permute.xlu0 %640
      %642 = vrot.lane.b32.xlu0 %v634, 1
      %v643 = vpop.permute.xlu0 %642
      %v644 = vsel %vm386, %v639, %v641
      %v645 = vsel %vm386, %v641, %v643
      %v648 = vsel %vm318, %v644, 0.0
      %v649 = vsel %vm319, %v645, 0.0
      %650 = vst [vmem:[#allocation4 + $0x30] sm:$0xff] %v648
      %651 = vst [vmem:[#allocation4 + $0x38] sm:$0xff] %v649
      %v652 = vld [vmem:[#allocation3 + $0x8] sm:$0xff]
      %v653 = vld [vmem:[#allocation3 + $0x10] sm:$0xff]
      %654 = vst [vmem:[#allocation4 + $0x40] sm:$0xff] %v652
      %655 = vst [vmem:[#allocation4 + $0x48] sm:$0xff] %v653
      %v656 = vld [vmem:[#allocation3 + $0x8] sm:$0xff]
      %v657 = vld [vmem:[#allocation3 + $0x10] sm:$0xff]
      %v658 = vld [vmem:[#allocation3 + $0x18] sm:$0xff]
      %662 = vrot.lane.b32.xlu0 %v656, 127
      %v663 = vpop.permute.xlu0 %662
      %664 = vrot.lane.b32.xlu0 %v657, 127
      %v665 = vpop.permute.xlu0 %664
      %666 = vrot.lane.b32.xlu0 %v658, 127
      %v667 = vpop.permute.xlu0 %666
      %v668 = vsel %vm409, %v663, %v665
      %v669 = vsel %vm409, %v665, %v667
      %v672 = vsel %vm320, %v668, 0.0
      %v673 = vsel %vm321, %v669, 0.0
      %674 = vst [vmem:[#allocation4 + $0x50] sm:$0xff] %v672
      %675 = vst [vmem:[#allocation4 + $0x58] sm:$0xff] %v673
      %v676 = vld [vmem:[#allocation3 + $0x8] sm:$0xff]
      %v677 = vld [vmem:[#allocation3 + $0x10] sm:$0xff]
      %v678 = vld [vmem:[#allocation3 + $0x18] sm:$0xff]
      %682 = vrot.lane.b32.xlu0 %v676, 113
      %v683 = vpop.permute.xlu0 %682
      %684 = vrot.lane.b32.xlu0 %v677, 113
      %v685 = vpop.permute.xlu0 %684
      %686 = vrot.lane.b32.xlu0 %v678, 113
      %v687 = vpop.permute.xlu0 %686
      %v688 = vsel %vm427, %v683, %v685
      %v689 = vsel %vm427, %v685, %v687
      %v692 = vsel %vm318, %v688, 0.0
      %v693 = vsel %vm319, %v689, 0.0
      %694 = vst [vmem:[#allocation4 + $0x60] sm:$0xff] %v692
      %695 = vst [vmem:[#allocation4 + $0x68] sm:$0xff] %v693
      %v696 = vld [vmem:[#allocation3 + $0x8] sm:$0xff]
      %v697 = vld [vmem:[#allocation3 + $0x10] sm:$0xff]
      %v698 = vld [vmem:[#allocation3 + $0x18] sm:$0xff]
      %702 = vrot.lane.b32.xlu0 %v696, 112
      %v703 = vpop.permute.xlu0 %702
      %704 = vrot.lane.b32.xlu0 %v697, 112
      %v705 = vpop.permute.xlu0 %704
      %706 = vrot.lane.b32.xlu0 %v698, 112
      %v707 = vpop.permute.xlu0 %706
      %v708 = vsel %vm446, %v703, %v705
      %v709 = vsel %vm446, %v705, %v707
      %712 = vst [vmem:[#allocation4 + $0x70] sm:$0xff] %v708
      %713 = vst [vmem:[#allocation4 + $0x78] sm:$0xff] %v709
      %v714 = vld [vmem:[#allocation3 + $0x8] sm:$0xff]
      %v715 = vld [vmem:[#allocation3 + $0x10] sm:$0xff]
      %v716 = vld [vmem:[#allocation3 + $0x18] sm:$0xff]
      %720 = vrot.lane.b32.xlu0 %v714, 111
      %v721 = vpop.permute.xlu0 %720
      %722 = vrot.lane.b32.xlu0 %v715, 111
      %v723 = vpop.permute.xlu0 %722
      %724 = vrot.lane.b32.xlu0 %v716, 111
      %v725 = vpop.permute.xlu0 %724
      %v726 = vsel %vm456, %v721, %v723
      %v727 = vsel %vm456, %v723, %v725
      %v730 = vsel %vm320, %v726, 0.0
      %v731 = vsel %vm321, %v727, 0.0
      %732 = vst [vmem:[#allocation4 + $0x80] sm:$0xff] %v730
      %733 = vst [vmem:[#allocation4 + $0x88] sm:$0xff] %v731
      %v734 = vld [vmem:[%s5] sm:$0xff]
      %v735 = vld [vmem:[#allocation4] sm:$0xff]
      %v736 = vld [vmem:[#allocation4 + $0x8] sm:$0xff]
      %v737 = vld [vmem:[#allocation4 + $0x10] sm:$0xff]
      %v738 = vld [vmem:[#allocation4 + $0x18] sm:$0xff]
      %v739 = vld [vmem:[#allocation4 + $0x20] sm:$0xff]
      %v740 = vld [vmem:[#allocation4 + $0x28] sm:$0xff]
      %v741 = vld [vmem:[#allocation4 + $0x30] sm:$0xff]
      %v742 = vld [vmem:[#allocation4 + $0x38] sm:$0xff]
      %v743 = vld [vmem:[#allocation4 + $0x40] sm:$0xff]
      %v744 = vld [vmem:[#allocation4 + $0x48] sm:$0xff]
      %v745 = vld [vmem:[#allocation4 + $0x50] sm:$0xff]
      %v746 = vld [vmem:[#allocation4 + $0x58] sm:$0xff]
      %v747 = vld [vmem:[#allocation4 + $0x60] sm:$0xff]
      %v748 = vld [vmem:[#allocation4 + $0x68] sm:$0xff]
      %v749 = vld [vmem:[#allocation4 + $0x70] sm:$0xff]
      %v750 = vld [vmem:[#allocation4 + $0x78] sm:$0xff]
      %v751 = vld [vmem:[#allocation4 + $0x80] sm:$0xff]
      %v752 = vld [vmem:[#allocation4 + $0x88] sm:$0xff]
      %vm753 = vcmask 588800
      %v755 = vsel %vm753, %v734, 0
      %757 = vmatprep.subr.mxu0 %v736
      %758 = vmatpush1.msra.mxu0 %v735
      %759 = vmatprep.subr.mxu0 %v738
      %760 = vmatpush1.msra.mxu0 %v737
      %761 = vmatprep.subr.mxu0 %v740
      %762 = vmatpush1.msra.mxu0 %v739
      %763 = vmatprep.subr.mxu0 %v742
      %764 = vmatpush1.msra.mxu0 %v741
      %765 = vmatprep.subr.mxu0 %v744
      %766 = vmatpush1.msra.mxu0 %v743
      %767 = vmatprep.subr.mxu0 %v746
      %768 = vmatpush1.msra.mxu0 %v745
      %769 = vmatprep.subr.mxu0 %v748
      %770 = vmatpush1.msra.mxu0 %v747
      %771 = vmatprep.subr.mxu0 %v750
      %772 = vmatpush1.msra.mxu0 %v749
      %773 = vmatprep.subr.mxu0 %v752
      %774 = vmatpush1.msra.mxu0 %v751
      %775 = vmatprep.subr.mxu0 0.0
      %776 = vmatpush1.msra.mxu0 0.0
      %777 = vmatprep.subr.mxu0 0.0
      %778 = vmatpush1.msra.mxu0 0.0
      %779 = vmatprep.subr.mxu0 0.0
      %780 = vmatpush1.msra.mxu0 0.0
      %781 = vmatprep.subr.mxu0 0.0
      %782 = vmatpush1.msra.mxu0 0.0
      %783 = vmatprep.subr.mxu0 0.0
      %784 = vmatpush1.msra.mxu0 0.0
      %785 = vmatprep.subr.mxu0 0.0
      %786 = vmatpush1.msra.mxu0 0.0
      %787 = vmatprep.subr.mxu0 0.0
      %788 = vmatpush1.msra.mxu0 0.0
      %789 = vmatprep.subr.mxu0 0.0
      %790 = vmatpush1.msra.mxu0 0.0
      %791 = vmatprep.subr.mxu0 0.0
      %792 = vmatpush1.msra.mxu0 0.0
      %793 = vmatprep.subr.mxu0 0.0
      %794 = vmatpush1.msra.mxu0 0.0
      %795 = vmatprep.subr.mxu0 0.0
      %796 = vmatpush1.msra.mxu0 0.0
      %797 = vmatprep.subr.mxu0 0.0
      %798 = vmatpush1.msra.mxu0 0.0
      %799 = vmatprep.subr.mxu0 0.0
      %800 = vmatpush1.msra.mxu0 0.0
      %801 = vmatprep.subr.mxu0 0.0
      %802 = vmatpush1.msra.mxu0 0.0
      %803 = vmatprep.subr.mxu0 0.0
      %804 = vmatpush1.msra.mxu0 0.0
      %805 = vmatprep.subr.mxu0 0.0
      %806 = vmatpush1.msra.mxu0 0.0
      %807 = vmatprep.subr.mxu0 0.0
      %808 = vmatpush1.msra.mxu0 0.0
      %809 = vmatprep.subr.mxu0 0.0
      %810 = vmatpush1.msra.mxu0 0.0
      %811 = vmatprep.subr.mxu0 0.0
      %812 = vmatpush1.msra.mxu0 0.0
      %813 = vmatprep.subr.mxu0 0.0
      %814 = vmatpush1.msra.mxu0 0.0
      %815 = vmatprep.subr.mxu0 0.0
      %816 = vmatpush1.msra.mxu0 0.0
      %817 = vmatprep.subr.mxu0 0.0
      %818 = vmatpush1.msra.mxu0 0.0
      %819 = vmatprep.subr.mxu0 0.0
      %820 = vmatpush1.msra.mxu0 0.0
      %821 = vmatprep.mubr.f32.mxu0 0.0
      %822 = vmatmul.mubr.f32.gmra.mrb[0].mxu0 %v755
      %v823 = vpop.f32.mrb[0].mxu0
      %v824 = vadd.f32 0.0, %v823
      %v825 = vpop.f32.mrb[0].mxu0
      %v826 = vadd.f32 0.0, %v825
      %827 = vdwg.mxu0
      %v828 = vld [vmem:[%s6] sm:$0xff]
      %830 = vset.pattern.permute.xlu0 0
      %831 = vperm.xlu0 %830, %v828
      %v832 = vpop.permute.xlu0 %831
      %v834 = vmul.f32 %v824, %v832
      %v835 = vmul.f32 %v826, %v832
      %v836 = vld [vmem:[%s7] sm:$0xff]
      %838 = vset.pattern.permute.xlu0 0
      %839 = vperm.xlu0 %838, %v836
      %v840 = vpop.permute.xlu0 %839
      %v842 = vadd.f32 %v834, %v840
      %v843 = vadd.f32 %v835, %v840
      %v844 = vmax.f32 %v842, 0.0
      %v845 = vmax.f32 %v843, 0.0
      %846 = vst [vmem:[%s305] sm:$0xff] %v844
      %847 = vst [vmem:[%s305 + $0x8] sm:$0xff] %v845
      %p848 = scmp.lt.s32.totalorder %s19, 1
      %s849 = scalar_select %p848, %s19, 1
      %s850 = smul.addr %s849, 2
      %s851 = smul.addr %s850, 8
      %s852 = scalar_lea.vmem %s8, %s851
      // Predicated region
      $region53: #{routeb_forward.1} parent=51 // pred_check
        %p853 = pneg %p210
      $region54: #{routeb_forward.1} parent=51 // pred_check_branch
        %855 = sbr.rel (%p853) target = $region56
      $region55: #{routeb_forward.1} parent=51 // pred_region
        _
      $region56: #{routeb_forward.1} parent=51 // pred_fallthru
        _
    $region52: #{routeb_forward.1} parent=5 // pred_fallthru
      _
    %p856 = scmp.le.s32.totalorder 2, %s14
    // Predicated region
    $region57: #{routeb_forward.1} parent=5 // pred_check
      %p857 = pneg %p856
    $region58: #{routeb_forward.1} parent=5 // pred_check_branch
      %859 = sbr.rel (%p857) target = $region60
    $region59: #{routeb_forward.1} parent=5 // pred_region
      %s860 = ssub.s32 %s14, 2
      // Predicated region
      $region61: #{routeb_forward.1} parent=59 // pred_check
        %p861 = pneg %p216
      $region62: #{routeb_forward.1} parent=59 // pred_check_branch
        %863 = sbr.rel (%p861) target = $region64
      $region63: #{routeb_forward.1} parent=59 // pred_region
        %p864 = scmp.lt.s32.totalorder %s20, 1
        %s865 = scalar_select %p864, %s20, 1
        %s866 = smul.addr %s865, 2
        %s867 = smul.addr %s866, 8
        %s868 = scalar_lea.vmem %s8, %s867
      $region64: #{routeb_forward.1} parent=59 // pred_fallthru
        _
    $region60: #{routeb_forward.1} parent=5 // pred_fallthru
      _
  $region6: #{routeb_forward.1} parent=0 // loop_footer
    %s18 = sadd.s32 1, %s14
  $region7: #{routeb_forward.1} parent=0 // loop_footer_branch
    %13 = sbr.rel target = $region3
  $region8: #{routeb_forward.1} parent=0 // loop_exit
    _

</llo_original>
